<compile_context>
chip_gen: v5e
topology: v5e:2x2
jax: 0.10.0
libtpu: 0.0.40
codegen_flags: <defaults>
</compile_context>

<pallas_src>
import jax
import jax.numpy as jnp
import numpy as np
from jax.experimental import pallas as pl
from jax.experimental.pallas import tpu as pltpu

INPUT_SIZE = 32
HIDDEN = 128
N_PAIRS = 6
N_FA = 3
BATCH = 8

FUSED_H = 2 * HIDDEN                          # 256: power hidden 0..127, fa hidden 128..255
OUT_W = 2 * N_PAIRS + N_PAIRS * N_FA          # 30: power 0..5, companions 6..11, fa 12..29

# Packed constant-slab layout (all regions start on an 8-row boundary).
W1_OFF = 0                                    # rows [0, 32)   : W1  [32, 256]
B_OFF = 32                                    # rows [32, 35)  : b1, b2, b3 (row each)
MASK_OFF = 40                                 # rows [40, 70)  : group mask [30, 30]
W3_OFF = 72                                   # rows [72, 328) : W3 [256, 30] (mean-folded)
SLAB_ROWS = W3_OFF + FUSED_H                  # 328


def _dnn_kernel(x_ref, w2_ref, slab_ref, out_ref):
    x = x_ref[...]                                            # (Bb, 32) f32

    w1 = slab_ref[W1_OFF:W1_OFF + INPUT_SIZE, :]              # (32, 256)
    b1 = slab_ref[B_OFF:B_OFF + 1, :]                         # (1, 256)
    b2 = slab_ref[B_OFF + 1:B_OFF + 2, :]                     # (1, 256)
    b3 = slab_ref[B_OFF + 2:B_OFF + 3, 0:OUT_W]               # (1, 30)
    mask = slab_ref[MASK_OFF:MASK_OFF + OUT_W, 0:OUT_W]       # (30, 30) block-diag ones
    w3 = slab_ref[W3_OFF:W3_OFF + FUSED_H, 0:OUT_W]           # (256, 30)

    # ---- fused MLP: 3 matmuls cover both power_net and fa_net ----
    h = jnp.dot(x, w1, preferred_element_type=jnp.float32) + b1
    h = jnp.maximum(h, 0.0)
    h = jnp.dot(h, w2_ref[...], preferred_element_type=jnp.float32) + b2
    h = jnp.maximum(h, 0.0)
    # W3/b3 were pre-shifted by the per-group mean at pack time, so z is already
    # numerically safe for exp (at least one element per group is >= 0).
    z = jnp.dot(h, w3, preferred_element_type=jnp.float32) + b3        # (Bb, 30)

    # ---- unified softmax epilogue (sigmoid == 2-way softmax on power pairs) ----
    e = jnp.exp(z)
    denom = jnp.dot(e, mask, preferred_element_type=jnp.float32)       # per-group sums
    inv = pl.reciprocal(denom, approx=True)                            # EUP slot
    inv = inv * (2.0 - denom * inv)                                    # 1 Newton step -> ~f32
    out_ref[...] = e * inv                                             # single lane-dense store


def _pick_block_b(B):
    # Single grid step for modest batches (block == full dim is always legal);
    # for big batches use large multiple-of-8 blocks and keep >= 2 grid steps so
    # the "parallel" batch axis can use both TensorCores on v7x.
    if B <= 1024:
        return B
    half = (B + 1) // 2
    return min(2048, ((half + 7) // 8) * 8)


def test_dnn_forward(x, packed):
    W2, slab = packed
    B = x.shape[0]
    block_b = _pick_block_b(B)
    grid = (pl.cdiv(B, block_b),)

    flops = 2 * B * (INPUT_SIZE * FUSED_H + FUSED_H * FUSED_H
                     + FUSED_H * OUT_W + OUT_W * OUT_W)
    bytes_accessed = 4 * (x.size + W2.size + slab.size + B * OUT_W)
    cost = pl.CostEstimate(flops=flops,
                           transcendentals=B * OUT_W,
                           bytes_accessed=bytes_accessed)

    out = pl.pallas_call(
        _dnn_kernel,
        out_shape=jax.ShapeDtypeStruct((B, OUT_W), jnp.float32),
        grid=grid,
        in_specs=[
            pl.BlockSpec((block_b, INPUT_SIZE), lambda i: (i, 0)),
            pl.BlockSpec((FUSED_H, FUSED_H), lambda i: (0, 0)),    # W2 stays resident
            pl.BlockSpec((SLAB_ROWS, FUSED_H), lambda i: (0, 0)),  # constant slab resident
        ],
        out_specs=pl.BlockSpec((block_b, OUT_W), lambda i: (i, 0)),
        compiler_params=pltpu.CompilerParams(dimension_semantics=("parallel",)),
        cost_estimate=cost,
    )(x, W2, slab)

    power = out[:, :N_PAIRS]
    fa_probs = out[:, 2 * N_PAIRS:].reshape(B, N_PAIRS, N_FA)
    return power, fa_probs


test_dnn_forward = jax.jit(test_dnn_forward)


def init_params(key):
    """Deterministic PyTorch-style init. Linear weights stored as [in, out]."""
    ks = jax.random.split(key, 12)

    def lin(kw, kb, fan_in, fan_out):
        bound = 1.0 / np.sqrt(fan_in)
        w = jax.random.uniform(kw, (fan_in, fan_out), jnp.float32, -bound, bound)
        b = jax.random.uniform(kb, (1, fan_out), jnp.float32, -bound, bound)
        return w, b

    w1p, b1p = lin(ks[0], ks[1], INPUT_SIZE, HIDDEN)
    w2p, b2p = lin(ks[2], ks[3], HIDDEN, HIDDEN)
    w3p, b3p = lin(ks[4], ks[5], HIDDEN, N_PAIRS)
    w1f, b1f = lin(ks[6], ks[7], INPUT_SIZE, HIDDEN)
    w2f, b2f = lin(ks[8], ks[9], HIDDEN, HIDDEN)
    w3f, b3f = lin(ks[10], ks[11], HIDDEN, N_PAIRS * N_FA)
    return (w1p, b1p, w2p, b2p, w3p, b3p, w1f, b1f, w2f, b2f, w3f, b3f)


def pack_params(params):
    """One-time fusion of the two MLPs into W2 + one resident constant slab."""
    (w1p, b1p, w2p, b2p, w3p, b3p,
     w1f, b1f, w2f, b2f, w3f, b3f) = params

    W1 = jnp.concatenate([w1p, w1f], axis=1)                               # [32, 256]

    W2 = jnp.zeros((FUSED_H, FUSED_H), jnp.float32)
    W2 = W2.at[:HIDDEN, :HIDDEN].set(w2p).at[HIDDEN:, HIDDEN:].set(w2f)    # block-diag

    # Layer 3: lanes 0..5 power logits, 6..11 zero companions (sigmoid as 2-way
    # softmax), 12..29 fa logits.
    W3 = jnp.zeros((FUSED_H, OUT_W), jnp.float32)
    W3 = W3.at[:HIDDEN, :N_PAIRS].set(w3p)
    W3 = W3.at[HIDDEN:, 2 * N_PAIRS:].set(w3f)
    b3 = jnp.zeros((1, OUT_W), jnp.float32)
    b3 = b3.at[:, :N_PAIRS].set(b3p).at[:, 2 * N_PAIRS:].set(b3f)

    # Group ids: power pair i = {i, i+6}; fa group g = {12+3g, 13+3g, 14+3g}.
    gid = np.zeros((OUT_W,), np.int32)
    gid[:N_PAIRS] = np.arange(N_PAIRS)
    gid[N_PAIRS:2 * N_PAIRS] = np.arange(N_PAIRS)
    gid[2 * N_PAIRS:] = N_PAIRS + np.repeat(np.arange(N_PAIRS), N_FA)
    mask_np = (gid[:, None] == gid[None, :]).astype(np.float32)            # [30, 30]
    mean_np = mask_np / mask_np.sum(axis=0, keepdims=True)                 # col-normalized

    # Fold the per-group mean shift into W3/b3 (softmax is shift-invariant).
    fold = jnp.asarray(np.eye(OUT_W, dtype=np.float32) - mean_np)
    W3 = W3 @ fold
    b3 = b3 @ fold

    b1 = jnp.concatenate([b1p, b1f], axis=1)                               # [1, 256]
    b2 = jnp.concatenate([b2p, b2f], axis=1)                               # [1, 256]

    slab = jnp.zeros((SLAB_ROWS, FUSED_H), jnp.float32)
    slab = slab.at[W1_OFF:W1_OFF + INPUT_SIZE, :].set(W1)
    slab = slab.at[B_OFF, :].set(b1[0])
    slab = slab.at[B_OFF + 1, :].set(b2[0])
    slab = slab.at[B_OFF + 2, :OUT_W].set(b3[0])
    slab = slab.at[MASK_OFF:MASK_OFF + OUT_W, :OUT_W].set(jnp.asarray(mask_np))
    slab = slab.at[W3_OFF:W3_OFF + FUSED_H, :OUT_W].set(W3)
    return (W2, slab)


def reference_forward(x, params):
    (w1p, b1p, w2p, b2p, w3p, b3p,
     w1f, b1f, w2f, b2f, w3f, b3f) = params
    h = jnp.maximum(x @ w1p + b1p, 0.0)
    h = jnp.maximum(h @ w2p + b2p, 0.0)
    power = jax.nn.sigmoid(h @ w3p + b3p)
    g = jnp.maximum(x @ w1f + b1f, 0.0)
    g = jnp.maximum(g @ w2f + b2f, 0.0)
    fa = (g @ w3f + b3f).reshape(-1, N_PAIRS, N_FA)
    return power, jax.nn.softmax(fa, axis=-1)


if __name__ == "__main__":
    key = jax.random.PRNGKey(0)
    kx, kp = jax.random.split(key)
    x = jax.random.normal(kx, (BATCH, INPUT_SIZE), jnp.float32)
    params = init_params(kp)
    packed = pack_params(params)

    power, fa_probs = test_dnn_forward(x, packed)
    jax.block_until_ready((power, fa_probs))

    ref_power, ref_fa = reference_forward(x, params)
    assert power.shape == (BATCH, N_PAIRS)
    assert fa_probs.shape == (BATCH, N_PAIRS, N_FA)
    np.testing.assert_allclose(np.asarray(power), np.asarray(ref_power),
                               rtol=1e-5, atol=1e-5)
    np.testing.assert_allclose(np.asarray(fa_probs), np.asarray(ref_fa),
                               rtol=1e-5, atol=1e-5)

    print("KERNEL_OK")
</pallas_src>

<mosaic_0001>
module attributes {stable_mosaic.version = 11 : i64} {
  func.func @_dnn_kernel(%arg0: i32, %arg1: memref<8x32xf32, #tpu.memory_space<vmem>>, %arg2: memref<256x256xf32, #tpu.memory_space<vmem>>, %arg3: memref<328x256xf32, #tpu.memory_space<vmem>>, %arg4: memref<8x30xf32, #tpu.memory_space<vmem>>) attributes {dimension_semantics = [#tpu.dimension_semantics<parallel>], iteration_bounds = array<i64: 1>, scalar_prefetch = 0 : i64, scratch_operands = 0 : i64, tpu.core_type = #tpu.core_type<tc>, window_params = [{transform_indices = @transform_0, window_bounds = array<i64: 8, 32>}, {pipeline_mode = #tpu.pipeline_mode<synchronous>, transform_indices = @transform_1, window_bounds = array<i64: 256, 256>}, {pipeline_mode = #tpu.pipeline_mode<synchronous>, transform_indices = @transform_2, window_bounds = array<i64: 328, 256>}, {transform_indices = @transform_3, window_bounds = array<i64: 8, 30>}]} {
    %c0 = arith.constant 0 : index
    %c0_0 = arith.constant 0 : index
    %0 = vector.load %arg1[%c0, %c0_0] : memref<8x32xf32, #tpu.memory_space<vmem>>, vector<8x32xf32>
    %c0_1 = arith.constant 0 : index
    %c0_2 = arith.constant 0 : index
    %1 = vector.load %arg3[%c0_1, %c0_2] : memref<328x256xf32, #tpu.memory_space<vmem>>, vector<32x256xf32>
    %c32 = arith.constant 32 : index
    %c0_3 = arith.constant 0 : index
    %2 = vector.load %arg3[%c32, %c0_3] : memref<328x256xf32, #tpu.memory_space<vmem>>, vector<1x256xf32>
    %c33 = arith.constant 33 : index
    %c0_4 = arith.constant 0 : index
    %3 = vector.load %arg3[%c33, %c0_4] : memref<328x256xf32, #tpu.memory_space<vmem>>, vector<1x256xf32>
    %c34 = arith.constant 34 : index
    %c0_5 = arith.constant 0 : index
    %4 = vector.load %arg3[%c34, %c0_5] : memref<328x256xf32, #tpu.memory_space<vmem>>, vector<1x30xf32>
    %c40 = arith.constant 40 : index
    %c0_6 = arith.constant 0 : index
    %5 = vector.load %arg3[%c40, %c0_6] : memref<328x256xf32, #tpu.memory_space<vmem>>, vector<30x30xf32>
    %c72 = arith.constant 72 : index
    %c0_7 = arith.constant 0 : index
    %6 = vector.load %arg3[%c72, %c0_7] : memref<328x256xf32, #tpu.memory_space<vmem>>, vector<256x30xf32>
    %cst = arith.constant dense<0.000000e+00> : vector<8x256xf32>
    %7 = tpu.matmul %0, %1, %cst {dimension_numbers = #tpu.dot_dimension_numbers<[1], [0], [0], [1], [0, 0, 1, 1], [], []>} : vector<8x32xf32>, vector<32x256xf32>, vector<8x256xf32> -> vector<8x256xf32>
    %8 = vector.broadcast %2 : vector<1x256xf32> to vector<8x256xf32>
    %9 = arith.addf %7, %8 : vector<8x256xf32>
    %cst_8 = arith.constant 0.000000e+00 : f32
    %10 = vector.broadcast %cst_8 : f32 to vector<8x256xf32>
    %11 = arith.maximumf %9, %10 : vector<8x256xf32>
    %c0_9 = arith.constant 0 : index
    %c0_10 = arith.constant 0 : index
    %12 = vector.load %arg2[%c0_9, %c0_10] : memref<256x256xf32, #tpu.memory_space<vmem>>, vector<256x256xf32>
    %cst_11 = arith.constant dense<0.000000e+00> : vector<8x256xf32>
    %13 = tpu.matmul %11, %12, %cst_11 {dimension_numbers = #tpu.dot_dimension_numbers<[1], [0], [0], [1], [0, 0, 1, 1], [], []>} : vector<8x256xf32>, vector<256x256xf32>, vector<8x256xf32> -> vector<8x256xf32>
    %14 = vector.broadcast %3 : vector<1x256xf32> to vector<8x256xf32>
    %15 = arith.addf %13, %14 : vector<8x256xf32>
    %cst_12 = arith.constant 0.000000e+00 : f32
    %16 = vector.broadcast %cst_12 : f32 to vector<8x256xf32>
    %17 = arith.maximumf %15, %16 : vector<8x256xf32>
    %cst_13 = arith.constant dense<0.000000e+00> : vector<8x30xf32>
    %18 = tpu.matmul %17, %6, %cst_13 {dimension_numbers = #tpu.dot_dimension_numbers<[1], [0], [0], [1], [0, 0, 1, 1], [], []>} : vector<8x256xf32>, vector<256x30xf32>, vector<8x30xf32> -> vector<8x30xf32>
    %19 = vector.broadcast %4 : vector<1x30xf32> to vector<8x30xf32>
    %20 = arith.addf %18, %19 : vector<8x30xf32>
    %21 = math.exp %20 : vector<8x30xf32>
    %cst_14 = arith.constant dense<0.000000e+00> : vector<8x30xf32>
    %22 = tpu.matmul %21, %5, %cst_14 {dimension_numbers = #tpu.dot_dimension_numbers<[1], [0], [0], [1], [0, 0, 1, 1], [], []>} : vector<8x30xf32>, vector<30x30xf32>, vector<8x30xf32> -> vector<8x30xf32>
    %23 = tpu.reciprocal %22 {approx = true} : vector<8x30xf32> -> vector<8x30xf32>
    %24 = arith.mulf %22, %23 : vector<8x30xf32>
    %cst_15 = arith.constant 2.000000e+00 : f32
    %25 = vector.broadcast %cst_15 : f32 to vector<8x30xf32>
    %26 = arith.subf %25, %24 : vector<8x30xf32>
    %27 = arith.mulf %23, %26 : vector<8x30xf32>
    %28 = arith.mulf %21, %27 : vector<8x30xf32>
    %c0_16 = arith.constant 0 : index
    %c0_17 = arith.constant 0 : index
    %29 = vector.load %arg4[%c0_16, %c0_17] : memref<8x30xf32, #tpu.memory_space<vmem>>, vector<8x30xf32>
    tpu.vector_store %arg4[%c0_16, %c0_17], %28 {strides = array<i32>} : memref<8x30xf32, #tpu.memory_space<vmem>>, vector<8x30xf32>,
    return
  }
  func.func @transform_0(%arg0: i32) -> (i32, i32) {
    %c0_i32 = arith.constant 0 : i32
    %c0_i32_0 = arith.constant 0 : i32
    return %arg0, %c0_i32 : i32, i32
  }
  func.func @transform_1(%arg0: i32) -> (i32, i32) {
    %c0_i32 = arith.constant 0 : i32
    %c0_i32_0 = arith.constant 0 : i32
    %c0_i32_1 = arith.constant 0 : i32
    return %c0_i32, %c0_i32_0 : i32, i32
  }
  func.func @transform_2(%arg0: i32) -> (i32, i32) {
    %c0_i32 = arith.constant 0 : i32
    %c0_i32_0 = arith.constant 0 : i32
    %c0_i32_1 = arith.constant 0 : i32
    return %c0_i32, %c0_i32_0 : i32, i32
  }
  func.func @transform_3(%arg0: i32) -> (i32, i32) {
    %c0_i32 = arith.constant 0 : i32
    %c0_i32_0 = arith.constant 0 : i32
    return %arg0, %c0_i32 : i32, i32
  }
}

</mosaic_0001>

<llo_original>
// kernel: test_dnn_forward.1
$region0: #{test_dnn_forward.1}
  #allocation0 [shape = 'u32[]', space=smem, size = 0x4, offset = 0x4, fixed_abs, tag = 'smem constant byte address 0x4 - core index']
  #allocation1 [shape = 'u32[72,128]{1,0:T(1,128)}', space=vmem, size = 0x9000, scoped, tag = 'internal scratch']
  %s0 = inlined_call_operand.hbm [shape: f32[8,32], index: 0, kind: input, shape index: {}]
  %s1 = inlined_call_operand.hbm [shape: f32[256,256], index: 1, kind: input, shape index: {}]
  %s2 = inlined_call_operand.hbm [shape: f32[328,256], index: 2, kind: input, shape index: {}]
  %s3 = inlined_call_operand.vmem [shape: f32[8,30], index: 3, kind: output, shape index: {}]
  %s4 = sld [smem:[#allocation0]]
  $region34: #{test_dnn_forward.1} parent=0
    _
  %s6 = ssub.s32 1, %s4
  %s7 = scalar_select 0, %s6, %s4
  $region1: #{test_dnn_forward.1} parent=0
    #allocation2 [shape = 'u8[4096]{0}', space=vmem, size = 0x1000, scoped, tag = 'input window, operand 0, single buffered']
    #allocation3 [shape = 's32[1]{0}', space=sflag, size = 0x4, scoped, tag = 'scoped memory for test_dnn_forward.1']
    #allocation4 [shape = 'u8[262144]{0}', space=vmem, size = 0x40000, scoped, tag = 'input window, operand 1, single buffered']
    #allocation5 [shape = 's32[1]{0}', space=sflag, size = 0x4, scoped, tag = 'scoped memory for test_dnn_forward.1']
    #allocation6 [shape = 'u8[335872]{0}', space=vmem, size = 0x52000, scoped, tag = 'input window, operand 2, single buffered']
    %8 = vsyncpa [#allocation3], 0
    %9 = vsyncpa [#allocation5], 0
    // Predicated region
    $region2: #{test_dnn_forward.1} parent=1 // pred_check
      _
    $region3: #{test_dnn_forward.1} parent=1 // pred_check_branch
      %11 = sbr.rel (0) target = $region5
    $region4: #{test_dnn_forward.1} parent=1 // pred_region
      %13 = vsyncadd [#allocation3], 0
      %s15 = sshll.u32 %s0, 4
      %s16 = int_to_ptr.hbm [resolvable:$true] %s15
      %s17 = sshll.u32 [#allocation2], 4
      %s18 = int_to_ptr.vmem [resolvable:$true] %s17
      %20 = dma.hbm_to_vmem [thread:$0]  %s16, 128, %s18, [#allocation3]
    $region5: #{test_dnn_forward.1} parent=1 // pred_fallthru
      _
    // Predicated region
    $region6: #{test_dnn_forward.1} parent=1 // pred_check
      _
    $region7: #{test_dnn_forward.1} parent=1 // pred_check_branch
      %22 = sbr.rel (0) target = $region9
    $region8: #{test_dnn_forward.1} parent=1 // pred_region
      %24 = vsyncadd [#allocation5], 0
      %s25 = sshll.u32 %s1, 4
      %s26 = int_to_ptr.hbm [resolvable:$true] %s25
      %s27 = sshll.u32 [#allocation4], 4
      %s28 = int_to_ptr.vmem [resolvable:$true] %s27
      %33 = dma.hbm_to_vmem [thread:$0]  %s26, 8192, %s28, [#allocation5], 256, 256, 16
    $region9: #{test_dnn_forward.1} parent=1 // pred_fallthru
      _
    // Predicated region
    $region10: #{test_dnn_forward.1} parent=1 // pred_check
      _
    $region11: #{test_dnn_forward.1} parent=1 // pred_check_branch
      %35 = sbr.rel (0) target = $region13
    $region12: #{test_dnn_forward.1} parent=1 // pred_region
      %37 = vsyncadd [#allocation5], 0
      %s38 = sshll.u32 %s2, 4
      %s39 = int_to_ptr.hbm [resolvable:$true] %s38
      %s40 = sshll.u32 [#allocation6], 4
      %s41 = int_to_ptr.vmem [resolvable:$true] %s40
      %46 = dma.hbm_to_vmem [thread:$0]  %s39, 10496, %s41, [#allocation5], 256, 256, 16
    $region13: #{test_dnn_forward.1} parent=1 // pred_fallthru
      _
    // Predicated region
    $region14: #{test_dnn_forward.1} parent=1 // pred_check
      _
    $region15: #{test_dnn_forward.1} parent=1 // pred_check_branch
      %48 = sbr.rel (0) target = $region17
    $region16: #{test_dnn_forward.1} parent=1 // pred_region
      %50 = dma.done [#allocation3], 128
    $region17: #{test_dnn_forward.1} parent=1 // pred_fallthru
      _
    // Predicated region
    $region18: #{test_dnn_forward.1} parent=1 // pred_check
      _
    $region19: #{test_dnn_forward.1} parent=1 // pred_check_branch
      %52 = sbr.rel (0) target = $region21
    $region20: #{test_dnn_forward.1} parent=1 // pred_region
      %54 = dma.done [#allocation5], 8192
    $region21: #{test_dnn_forward.1} parent=1 // pred_fallthru
      _
    // Predicated region
    $region22: #{test_dnn_forward.1} parent=1 // pred_check
      _
    $region23: #{test_dnn_forward.1} parent=1 // pred_check_branch
      %56 = sbr.rel (0) target = $region25
    $region24: #{test_dnn_forward.1} parent=1 // pred_region
      %58 = dma.done [#allocation5], 10496
    $region25: #{test_dnn_forward.1} parent=1 // pred_fallthru
      _
    %v59 = vld [vmem:[#allocation2] sm:$0xff]
    %v60 = vld [vmem:[#allocation6] sm:$0xff]
    %v61 = vld [vmem:[#allocation6 + $0x8] sm:$0xff]
    %v62 = vld [vmem:[#allocation6 + $0x10] sm:$0xff]
    %v63 = vld [vmem:[#allocation6 + $0x18] sm:$0xff]
    %v64 = vld [vmem:[#allocation6 + $0x20] sm:$0xff]
    %v65 = vld [vmem:[#allocation6 + $0x28] sm:$0xff]
    %v66 = vld [vmem:[#allocation6 + $0x30] sm:$0xff]
    %v67 = vld [vmem:[#allocation6 + $0x38] sm:$0xff]
    %s68 = scalar_lea.vmem [#allocation6], 64
    %v69 = vld [vmem:[%s68] ss:$8 sm:$0x3]
    %s70 = scalar_lea.vmem [#allocation6], 65
    %v71 = vld [vmem:[%s70] ss:$8 sm:$0x3]
    %v72 = vld [vmem:[#allocation6 + $0x42] ss:$0 sm:$0xff]
    %v73 = vld [vmem:[#allocation6 + $0x50] sm:$0xff]
    %v74 = vld [vmem:[#allocation6 + $0x60] sm:$0xff]
    %v75 = vld [vmem:[#allocation6 + $0x70] sm:$0xff]
    %v76 = vld [vmem:[#allocation6 + $0x80] sm:$0x3f]
    %v77 = vld [vmem:[#allocation6 + $0x90] sm:$0xff]
    %v78 = vld [vmem:[#allocation6 + $0xa0] sm:$0xff]
    %v79 = vld [vmem:[#allocation6 + $0xb0] sm:$0xff]
    %v80 = vld [vmem:[#allocation6 + $0xc0] sm:$0xff]
    %v81 = vld [vmem:[#allocation6 + $0xd0] sm:$0xff]
    %v82 = vld [vmem:[#allocation6 + $0xe0] sm:$0xff]
    %v83 = vld [vmem:[#allocation6 + $0xf0] sm:$0xff]
    %v84 = vld [vmem:[#allocation6 + $0x100] sm:$0xff]
    %v85 = vld [vmem:[#allocation6 + $0x110] sm:$0xff]
    %v86 = vld [vmem:[#allocation6 + $0x120] sm:$0xff]
    %v87 = vld [vmem:[#allocation6 + $0x130] sm:$0xff]
    %v88 = vld [vmem:[#allocation6 + $0x140] sm:$0xff]
    %v89 = vld [vmem:[#allocation6 + $0x150] sm:$0xff]
    %v90 = vld [vmem:[#allocation6 + $0x160] sm:$0xff]
    %v91 = vld [vmem:[#allocation6 + $0x170] sm:$0xff]
    %v92 = vld [vmem:[#allocation6 + $0x180] sm:$0xff]
    %v93 = vld [vmem:[#allocation6 + $0x190] sm:$0xff]
    %v94 = vld [vmem:[#allocation6 + $0x1a0] sm:$0xff]
    %v95 = vld [vmem:[#allocation6 + $0x1b0] sm:$0xff]
    %v96 = vld [vmem:[#allocation6 + $0x1c0] sm:$0xff]
    %v97 = vld [vmem:[#allocation6 + $0x1d0] sm:$0xff]
    %v98 = vld [vmem:[#allocation6 + $0x1e0] sm:$0xff]
    %v99 = vld [vmem:[#allocation6 + $0x1f0] sm:$0xff]
    %v100 = vld [vmem:[#allocation6 + $0x200] sm:$0xff]
    %v101 = vld [vmem:[#allocation6 + $0x210] sm:$0xff]
    %v102 = vld [vmem:[#allocation6 + $0x220] sm:$0xff]
    %v103 = vld [vmem:[#allocation6 + $0x230] sm:$0xff]
    %v104 = vld [vmem:[#allocation6 + $0x240] sm:$0xff]
    %v105 = vld [vmem:[#allocation6 + $0x250] sm:$0xff]
    %v106 = vld [vmem:[#allocation6 + $0x260] sm:$0xff]
    %v107 = vld [vmem:[#allocation6 + $0x270] sm:$0xff]
    %v108 = vld [vmem:[#allocation6 + $0x280] sm:$0xff]
    %v110 = vperm.slane %v69, 0
    %v111 = vperm.slane %v69, 1
    %vm114 = vcmask 261120
    %v116 = vsel %vm114, %v59, 0
    %118 = vmatpush.msra.mxu0 0.0
    %119 = vmatpush.msra.mxu0 0.0
    %120 = vmatpush.msra.mxu0 0.0
    %121 = vmatpush.msra.mxu0 0.0
    %122 = vmatpush.msra.mxu0 0.0
    %123 = vmatpush.msra.mxu0 0.0
    %124 = vmatpush.msra.mxu0 0.0
    %125 = vmatpush.msra.mxu0 0.0
    %126 = vmatpush.msra.mxu0 0.0
    %127 = vmatpush.msra.mxu0 0.0
    %128 = vmatpush.msra.mxu0 0.0
    %129 = vmatpush.msra.mxu0 0.0
    %130 = vmatpush.msra.mxu0 %v66
    %131 = vmatpush.msra.mxu0 %v64
    %132 = vmatpush.msra.mxu0 %v62
    %133 = vmatpush.msra.mxu0 %v60
    %134 = vmatmul.f32.gmra.mxu0 %v116
    %v135 = vpop.f32.mrf.mxu0
    %v136 = vadd.f32 %v110, %v135
    %137 = vdwg.mxu0
    %138 = vmatpush.msra.mxu0 0.0
    %139 = vmatpush.msra.mxu0 0.0
    %140 = vmatpush.msra.mxu0 0.0
    %141 = vmatpush.msra.mxu0 0.0
    %142 = vmatpush.msra.mxu0 0.0
    %143 = vmatpush.msra.mxu0 0.0
    %144 = vmatpush.msra.mxu0 0.0
    %145 = vmatpush.msra.mxu0 0.0
    %146 = vmatpush.msra.mxu0 0.0
    %147 = vmatpush.msra.mxu0 0.0
    %148 = vmatpush.msra.mxu0 0.0
    %149 = vmatpush.msra.mxu0 0.0
    %150 = vmatpush.msra.mxu0 %v67
    %151 = vmatpush.msra.mxu0 %v65
    %152 = vmatpush.msra.mxu0 %v63
    %153 = vmatpush.msra.mxu0 %v61
    %154 = vmatmul.f32.gmra.mxu0 %v116
    %v155 = vpop.f32.mrf.mxu0
    %v156 = vadd.f32 %v111, %v155
    %157 = vdwg.mxu0
    %v158 = vmax.f32 %v136, 0.0
    %v159 = vmax.f32 %v156, 0.0
    %v160 = vld [vmem:[#allocation4] sm:$0xff]
    %v161 = vld [vmem:[#allocation4 + $0x8] sm:$0xff]
    %v162 = vld [vmem:[#allocation4 + $0x10] sm:$0xff]
    %v163 = vld [vmem:[#allocation4 + $0x18] sm:$0xff]
    %v164 = vld [vmem:[#allocation4 + $0x20] sm:$0xff]
    %v165 = vld [vmem:[#allocation4 + $0x28] sm:$0xff]
    %v166 = vld [vmem:[#allocation4 + $0x30] sm:$0xff]
    %v167 = vld [vmem:[#allocation4 + $0x38] sm:$0xff]
    %v168 = vld [vmem:[#allocation4 + $0x40] sm:$0xff]
    %v169 = vld [vmem:[#allocation4 + $0x48] sm:$0xff]
    %v170 = vld [vmem:[#allocation4 + $0x50] sm:$0xff]
    %v171 = vld [vmem:[#allocation4 + $0x58] sm:$0xff]
    %v172 = vld [vmem:[#allocation4 + $0x60] sm:$0xff]
    %v173 = vld [vmem:[#allocation4 + $0x68] sm:$0xff]
    %v174 = vld [vmem:[#allocation4 + $0x70] sm:$0xff]
    %v175 = vld [vmem:[#allocation4 + $0x78] sm:$0xff]
    %v176 = vld [vmem:[#allocation4 + $0x80] sm:$0xff]
    %v177 = vld [vmem:[#allocation4 + $0x88] sm:$0xff]
    %v178 = vld [vmem:[#allocation4 + $0x90] sm:$0xff]
    %v179 = vld [vmem:[#allocation4 + $0x98] sm:$0xff]
    %v180 = vld [vmem:[#allocation4 + $0xa0] sm:$0xff]
    %v181 = vld [vmem:[#allocation4 + $0xa8] sm:$0xff]
    %v182 = vld [vmem:[#allocation4 + $0xb0] sm:$0xff]
    %v183 = vld [vmem:[#allocation4 + $0xb8] sm:$0xff]
    %v184 = vld [vmem:[#allocation4 + $0xc0] sm:$0xff]
    %v185 = vld [vmem:[#allocation4 + $0xc8] sm:$0xff]
    %v186 = vld [vmem:[#allocation4 + $0xd0] sm:$0xff]
    %v187 = vld [vmem:[#allocation4 + $0xd8] sm:$0xff]
    %v188 = vld [vmem:[#allocation4 + $0xe0] sm:$0xff]
    %v189 = vld [vmem:[#allocation4 + $0xe8] sm:$0xff]
    %v190 = vld [vmem:[#allocation4 + $0xf0] sm:$0xff]
    %v191 = vld [vmem:[#allocation4 + $0xf8] sm:$0xff]
    %v192 = vld [vmem:[#allocation4 + $0x100] sm:$0xff]
    %v193 = vld [vmem:[#allocation4 + $0x108] sm:$0xff]
    %v194 = vld [vmem:[#allocation4 + $0x110] sm:$0xff]
    %v195 = vld [vmem:[#allocation4 + $0x118] sm:$0xff]
    %v196 = vld [vmem:[#allocation4 + $0x120] sm:$0xff]
    %v197 = vld [vmem:[#allocation4 + $0x128] sm:$0xff]
    %v198 = vld [vmem:[#allocation4 + $0x130] sm:$0xff]
    %v199 = vld [vmem:[#allocation4 + $0x138] sm:$0xff]
    %v200 = vld [vmem:[#allocation4 + $0x140] sm:$0xff]
    %v201 = vld [vmem:[#allocation4 + $0x148] sm:$0xff]
    %v202 = vld [vmem:[#allocation4 + $0x150] sm:$0xff]
    %v203 = vld [vmem:[#allocation4 + $0x158] sm:$0xff]
    %v204 = vld [vmem:[#allocation4 + $0x160] sm:$0xff]
    %v205 = vld [vmem:[#allocation4 + $0x168] sm:$0xff]
    %v206 = vld [vmem:[#allocation4 + $0x170] sm:$0xff]
    %v207 = vld [vmem:[#allocation4 + $0x178] sm:$0xff]
    %v208 = vld [vmem:[#allocation4 + $0x180] sm:$0xff]
    %v209 = vld [vmem:[#allocation4 + $0x188] sm:$0xff]
    %v210 = vld [vmem:[#allocation4 + $0x190] sm:$0xff]
    %v211 = vld [vmem:[#allocation4 + $0x198] sm:$0xff]
    %v212 = vld [vmem:[#allocation4 + $0x1a0] sm:$0xff]
    %v213 = vld [vmem:[#allocation4 + $0x1a8] sm:$0xff]
    %v214 = vld [vmem:[#allocation4 + $0x1b0] sm:$0xff]
    %v215 = vld [vmem:[#allocation4 + $0x1b8] sm:$0xff]
    %v216 = vld [vmem:[#allocation4 + $0x1c0] sm:$0xff]
    %v217 = vld [vmem:[#allocation4 + $0x1c8] sm:$0xff]
    %v218 = vld [vmem:[#allocation4 + $0x1d0] sm:$0xff]
    %v219 = vld [vmem:[#allocation4 + $0x1d8] sm:$0xff]
    %v220 = vld [vmem:[#allocation4 + $0x1e0] sm:$0xff]
    %v221 = vld [vmem:[#allocation4 + $0x1e8] sm:$0xff]
    %v222 = vld [vmem:[#allocation4 + $0x1f0] sm:$0xff]
    %v223 = vld [vmem:[#allocation4 + $0x1f8] sm:$0xff]
    %v225 = vperm.slane %v71, 0
    %v226 = vperm.slane %v71, 1
    %229 = vmatpush.msra.mxu0 %v190
    %230 = vmatpush.msra.mxu0 %v188
    %231 = vmatpush.msra.mxu0 %v186
    %232 = vmatpush.msra.mxu0 %v184
    %233 = vmatpush.msra.mxu0 %v182
    %234 = vmatpush.msra.mxu0 %v180
    %235 = vmatpush.msra.mxu0 %v178
    %236 = vmatpush.msra.mxu0 %v176
    %237 = vmatpush.msra.mxu0 %v174
    %238 = vmatpush.msra.mxu0 %v172
    %239 = vmatpush.msra.mxu0 %v170
    %240 = vmatpush.msra.mxu0 %v168
    %241 = vmatpush.msra.mxu0 %v166
    %242 = vmatpush.msra.mxu0 %v164
    %243 = vmatpush.msra.mxu0 %v162
    %244 = vmatpush.msra.mxu0 %v160
    %245 = vmatmul.f32.gmra.mxu0 %v158
    %v246 = vpop.f32.mrf.mxu0
    %v247 = vadd.f32 %v225, %v246
    %248 = vdwg.mxu0
    %249 = vmatpush.msra.mxu0 %v222
    %250 = vmatpush.msra.mxu0 %v220
    %251 = vmatpush.msra.mxu0 %v218
    %252 = vmatpush.msra.mxu0 %v216
    %253 = vmatpush.msra.mxu0 %v214
    %254 = vmatpush.msra.mxu0 %v212
    %255 = vmatpush.msra.mxu0 %v210
    %256 = vmatpush.msra.mxu0 %v208
    %257 = vmatpush.msra.mxu0 %v206
    %258 = vmatpush.msra.mxu0 %v204
    %259 = vmatpush.msra.mxu0 %v202
    %260 = vmatpush.msra.mxu0 %v200
    %261 = vmatpush.msra.mxu0 %v198
    %262 = vmatpush.msra.mxu0 %v196
    %263 = vmatpush.msra.mxu0 %v194
    %264 = vmatpush.msra.mxu0 %v192
    %265 = vmatmul.f32.gmra.mxu0 %v159
    %v266 = vpop.f32.mrf.mxu0
    %v267 = vadd.f32 %v247, %v266
    %268 = vdwg.mxu0
    %269 = vmatpush.msra.mxu0 %v191
    %270 = vmatpush.msra.mxu0 %v189
    %271 = vmatpush.msra.mxu0 %v187
    %272 = vmatpush.msra.mxu0 %v185
    %273 = vmatpush.msra.mxu0 %v183
    %274 = vmatpush.msra.mxu0 %v181
    %275 = vmatpush.msra.mxu0 %v179
    %276 = vmatpush.msra.mxu0 %v177
    %277 = vmatpush.msra.mxu0 %v175
    %278 = vmatpush.msra.mxu0 %v173
    %279 = vmatpush.msra.mxu0 %v171
    %280 = vmatpush.msra.mxu0 %v169
    %281 = vmatpush.msra.mxu0 %v167
    %282 = vmatpush.msra.mxu0 %v165
    %283 = vmatpush.msra.mxu0 %v163
    %284 = vmatpush.msra.mxu0 %v161
    %285 = vmatmul.f32.gmra.mxu0 %v158
    %v286 = vpop.f32.mrf.mxu0
    %v287 = vadd.f32 %v226, %v286
    %288 = vdwg.mxu0
    %289 = vmatpush.msra.mxu0 %v223
    %290 = vmatpush.msra.mxu0 %v221
    %291 = vmatpush.msra.mxu0 %v219
    %292 = vmatpush.msra.mxu0 %v217
    %293 = vmatpush.msra.mxu0 %v215
    %294 = vmatpush.msra.mxu0 %v213
    %295 = vmatpush.msra.mxu0 %v211
    %296 = vmatpush.msra.mxu0 %v209
    %297 = vmatpush.msra.mxu0 %v207
    %298 = vmatpush.msra.mxu0 %v205
    %299 = vmatpush.msra.mxu0 %v203
    %300 = vmatpush.msra.mxu0 %v201
    %301 = vmatpush.msra.mxu0 %v199
    %302 = vmatpush.msra.mxu0 %v197
    %303 = vmatpush.msra.mxu0 %v195
    %304 = vmatpush.msra.mxu0 %v193
    %305 = vmatmul.f32.gmra.mxu0 %v159
    %v306 = vpop.f32.mrf.mxu0
    %v307 = vadd.f32 %v287, %v306
    %308 = vdwg.mxu0
    %v309 = vmax.f32 %v267, 0.0
    %v310 = vmax.f32 %v307, 0.0
    %311 = vmatpush.msra.mxu0 %v92
    %312 = vmatpush.msra.mxu0 %v91
    %313 = vmatpush.msra.mxu0 %v90
    %314 = vmatpush.msra.mxu0 %v89
    %315 = vmatpush.msra.mxu0 %v88
    %316 = vmatpush.msra.mxu0 %v87
    %317 = vmatpush.msra.mxu0 %v86
    %318 = vmatpush.msra.mxu0 %v85
    %319 = vmatpush.msra.mxu0 %v84
    %320 = vmatpush.msra.mxu0 %v83
    %321 = vmatpush.msra.mxu0 %v82
    %322 = vmatpush.msra.mxu0 %v81
    %323 = vmatpush.msra.mxu0 %v80
    %324 = vmatpush.msra.mxu0 %v79
    %325 = vmatpush.msra.mxu0 %v78
    %326 = vmatpush.msra.mxu0 %v77
    %327 = vmatmul.f32.gmra.mxu0 %v309
    %v328 = vpop.f32.mrf.mxu0
    %v329 = vadd.f32 %v72, %v328
    %330 = vdwg.mxu0
    %331 = vmatpush.msra.mxu0 %v108
    %332 = vmatpush.msra.mxu0 %v107
    %333 = vmatpush.msra.mxu0 %v106
    %334 = vmatpush.msra.mxu0 %v105
    %335 = vmatpush.msra.mxu0 %v104
    %336 = vmatpush.msra.mxu0 %v103
    %337 = vmatpush.msra.mxu0 %v102
    %338 = vmatpush.msra.mxu0 %v101
    %339 = vmatpush.msra.mxu0 %v100
    %340 = vmatpush.msra.mxu0 %v99
    %341 = vmatpush.msra.mxu0 %v98
    %342 = vmatpush.msra.mxu0 %v97
    %343 = vmatpush.msra.mxu0 %v96
    %344 = vmatpush.msra.mxu0 %v95
    %345 = vmatpush.msra.mxu0 %v94
    %346 = vmatpush.msra.mxu0 %v93
    %347 = vmatmul.f32.gmra.mxu0 %v310
    %v348 = vpop.f32.mrf.mxu0
    %v349 = vadd.f32 %v329, %v348
    %350 = vdwg.mxu0
    %v351 = vmul.f32 %v349, 1.442695
    %v352 = vpow.pop %v351
    %vm353 = vcmask 244736
    %v355 = vsel %vm353, %v352, 0
    %vm357 = vcmask 1045504
    %v359 = vsel %vm357, %v76, 0
    %361 = vmatpush.msra.mxu0 0.0
    %362 = vmatpush.msra.mxu0 0.0
    %363 = vmatpush.msra.mxu0 0.0
    %364 = vmatpush.msra.mxu0 0.0
    %365 = vmatpush.msra.mxu0 0.0
    %366 = vmatpush.msra.mxu0 0.0
    %367 = vmatpush.msra.mxu0 0.0
    %368 = vmatpush.msra.mxu0 0.0
    %369 = vmatpush.msra.mxu0 0.0
    %370 = vmatpush.msra.mxu0 0.0
    %371 = vmatpush.msra.mxu0 0.0
    %372 = vmatpush.msra.mxu0 0.0
    %373 = vmatpush.msra.mxu0 %v359
    %374 = vmatpush.msra.mxu0 %v75
    %375 = vmatpush.msra.mxu0 %v74
    %376 = vmatpush.msra.mxu0 %v73
    %377 = vmatmul.f32.gmra.mxu0 %v355
    %v378 = vpop.f32.mrf.mxu0
    %v379 = vadd.f32 0.0, %v378
    %380 = vdwg.mxu0
    %v381 = vrcp.pop %v379
    %v382 = vmul.f32 %v379, %v381
    %v383 = vsub.f32 2.0, %v382
    %v384 = vmul.f32 %v381, %v383
    %v385 = vmul.f32 %v352, %v384
    %386 = vst.msk [vmem:[%s3] sm:$0xff] %vm353, %v385
    // Predicated region
    $region26: #{test_dnn_forward.1} parent=1 // pred_check
      _
    $region27: #{test_dnn_forward.1} parent=1 // pred_check_branch
      %388 = sbr.rel (0) target = $region29
    $region28: #{test_dnn_forward.1} parent=1 // pred_region
      _
    $region29: #{test_dnn_forward.1} parent=1 // pred_fallthru
      _
    // Predicated region
    $region30: #{test_dnn_forward.1} parent=1 // pred_check
      _
    $region31: #{test_dnn_forward.1} parent=1 // pred_check_branch
      %390 = sbr.rel (0) target = $region33
    $region32: #{test_dnn_forward.1} parent=1 // pred_region
      _
    $region33: #{test_dnn_forward.1} parent=1 // pred_fallthru
      _
    %391 = vsyncpa [#allocation3], 1
    %392 = vsyncpa [#allocation5], 1

</llo_original>
